<compile_context>
chip_gen: v5e
topology: v5e:2x2
jax: 0.10.0
libtpu: 0.0.40
codegen_flags: <defaults>
</compile_context>

<pallas_src>
import math

import jax
import jax.numpy as jnp
from jax.experimental import pallas as pl
from jax.experimental.pallas import tpu as pltpu


# --------------------------------------------------------------------------- #
# Kernel
# --------------------------------------------------------------------------- #
def _make_kernel(has_mask):
    def kernel(*refs):
        if has_mask:
            x_ref, wa_ref, wb_ref, mask_ref, o_ref = refs
        else:
            x_ref, wa_ref, wb_ref, o_ref = refs

        bb, n_seq, dim = x_ref.shape
        da = wa_ref.shape[1]

        x = x_ref[...]                          # native dtype (f32 or bf16)
        wa = wa_ref[...]                        # (dim, da)
        wb = wb_ref[...]                        # (1, da)

        # --- alpha projection ------------------------------------------------
        # One tall MXU matmul for the whole batch block: (bb*N, dim)@(dim, da).
        # N % 8 == 0 keeps this reshape a free re-view.
        h = jnp.tanh(
            jnp.dot(x.reshape(bb * n_seq, dim), wa,
                    preferred_element_type=jnp.float32)
        ).reshape(bb, n_seq, da)                # (bb, N, da), f32

        # da -> 1 projection: degenerate 1-column matmul -> VPU broadcast
        # multiply + lane reduce (skip a 1/128-lane MXU pass).
        alpha = jnp.sum(h * wb.reshape(1, 1, da).astype(jnp.float32),
                        axis=-1)                # (bb, N), lane-major

        if has_mask:
            # Multiplicative mask, exactly as PyTorch `alpha = alpha * mask`.
            alpha = alpha * mask_ref[...].astype(jnp.float32)

        # --- softmax over the sequence (lane) axis ---------------------------
        a_max = jnp.max(alpha, axis=-1, keepdims=True)    # (bb, 1)
        e = jnp.exp(alpha - a_max)                        # (bb, N)
        denom = jnp.sum(e, axis=-1, keepdims=True)        # (bb, 1)
        # Exact reciprocal: the divide is only over a (bb, 1) vector.
        attn = e * pl.reciprocal(denom)                   # (bb, N)

        # --- weighted sum over the sequence: batched MXU contraction ---------
        # (bb, 1, N) @ (bb, N, dim) -> (bb, 1, dim).  No (bb, N, dim) f32
        # temporaries, no lane->sublane relayout of attn; MXU is idle here.
        attn3 = attn.reshape(bb, 1, n_seq).astype(x.dtype)
        out = jnp.einsum("bqn,bnd->bqd", attn3, x,
                         preferred_element_type=jnp.float32)
        o_ref[...] = out.reshape(bb, dim).astype(o_ref.dtype)

    return kernel


# --------------------------------------------------------------------------- #
# Generation-aware tiling helpers
# --------------------------------------------------------------------------- #
def _vmem_capacity_bytes():
    try:
        info = pltpu.get_tpu_info()
        cap = getattr(info, "vmem_capacity_bytes", None)
        if cap:
            return int(cap)
    except Exception:
        pass
    return 64 * 1024 * 1024          # conservative default (v7x-sized)


def _num_tensorcores():
    # v7x has 2 TensorCores per chip; v5e/v6e have 1.
    try:
        kind = jax.devices()[0].device_kind.lower()
        if "v7" in kind or "7x" in kind:
            return 2
    except Exception:
        pass
    return 1


def _per_row_vmem_bytes(N, dim, da, itemsize, has_mask):
    """Per batch row, per grid step: double-buffered operands + f32 temps."""
    x_tile = 2 * N * dim * itemsize               # x block (double-buffered)
    mask_tile = (2 * N * itemsize) if has_mask else 0
    out_tile = 2 * dim * itemsize                 # output block (double-buffered)
    h = N * da * 4                                # tanh activations, f32
    rows = 4 * N * 4                              # alpha / e / attn scratch, f32
    inter = 8 * (N + dim) * 4                     # q=1 intermediates (sublane pad)
    return x_tile + mask_tile + out_tile + h + rows + inter


def _choose_block_b(B, N, dim, da, itemsize, has_mask):
    cap = _vmem_capacity_bytes()
    budget = int(cap * 0.55)                      # leave room for weights/spills
    per_row = _per_row_vmem_bytes(N, dim, da, itemsize, has_mask)
    bb = budget // max(per_row, 1)
    bb = max(8, (bb // 8) * 8)                    # sublane-aligned
    bb = min(bb, 4096)
    if bb >= B:
        # Whole batch fits in one step.  Only on multi-TC chips (v7x) split
        # into two steps so the 'parallel' grid axis can shard across cores.
        if _num_tensorcores() > 1 and B >= 16:
            half = (((B + 1) // 2 + 7) // 8) * 8
            if half < B:
                return half
        return B
    return bb


def _vmem_limit_bytes(bb, N, dim, da, itemsize, has_mask):
    cap = _vmem_capacity_bytes()
    per_row = _per_row_vmem_bytes(N, dim, da, itemsize, has_mask)
    weights = 2 * (dim * da + da) * itemsize
    need = bb * per_row + weights
    limit = int(need * 1.5) + (4 << 20)
    limit = max(limit, 32 << 20)
    limit = min(limit, int(cap * 0.85))
    return limit


# --------------------------------------------------------------------------- #
# Wrapper
# --------------------------------------------------------------------------- #
def self_attention_pallas(inputs, wa, wb, mask=None, *, block_b=None):
    """inputs: (B, N, dim); wa: (dim, da); wb: (da, 1) or (da,);
    mask: (B, N, 1) / (B, N) / None."""
    B, N, dim = inputs.shape
    da = wa.shape[1]
    wb2 = wb.reshape(1, da)
    has_mask = mask is not None
    itemsize = jnp.dtype(inputs.dtype).itemsize

    if block_b is None:
        bb = _choose_block_b(B, N, dim, da, itemsize, has_mask)
    else:
        bb = int(block_b)
    if bb >= B or B <= 8:
        bb = B                                    # single full-batch block
    else:
        bb = max(8, (bb // 8) * 8)                # ragged grid: keep 8-aligned

    grid = (pl.cdiv(B, bb),)                      # no host-side padding copy

    in_specs = [
        pl.BlockSpec((bb, N, dim), lambda b: (b, 0, 0)),
        pl.BlockSpec((dim, da), lambda b: (0, 0)),
        pl.BlockSpec((1, da), lambda b: (0, 0)),
    ]
    args = [inputs, wa, wb2]
    if has_mask:
        in_specs.append(pl.BlockSpec((bb, N), lambda b: (b, 0)))
        args.append(mask.reshape(B, N))

    out = pl.pallas_call(
        _make_kernel(has_mask),
        out_shape=jax.ShapeDtypeStruct((B, dim), inputs.dtype),
        grid_spec=pltpu.PrefetchScalarGridSpec(
            num_scalar_prefetch=0,
            grid=grid,
            in_specs=in_specs,
            out_specs=pl.BlockSpec((bb, dim), lambda b: (b, 0)),
        ),
        compiler_params=pltpu.CompilerParams(
            dimension_semantics=("parallel",),
            vmem_limit_bytes=_vmem_limit_bytes(bb, N, dim, da, itemsize,
                                               has_mask),
        ),
    )(*args)
    return out


# --------------------------------------------------------------------------- #
# Reference + demo
# --------------------------------------------------------------------------- #
def _xavier_uniform(key, shape, gain):
    # shape = (fan_out, fan_in) like torch Linear.weight
    fan_out, fan_in = shape
    bound = gain * math.sqrt(6.0 / (fan_in + fan_out))
    return jax.random.uniform(key, shape, minval=-bound, maxval=bound,
                              dtype=jnp.float32)


def reference_jax(inputs, wa, wb, mask=None):
    alpha = jnp.tanh(inputs @ wa)          # (B, N, da)
    alpha = alpha @ wb                     # (B, N, 1)
    if mask is not None:
        alpha = alpha * mask
    alpha = jax.nn.softmax(alpha, axis=1)
    return jnp.squeeze(jnp.swapaxes(alpha, 1, 2) @ inputs, axis=1)


if __name__ == "__main__":
    B, N, dim, da = 2, 8, 32, 16
    key = jax.random.PRNGKey(0)
    k_x, k_wa, k_wb, k_m, k_x2, k_m2 = jax.random.split(key, 6)

    # Deterministic init mirroring xavier_uniform_(gain = tanh gain = 5/3).
    gain = 5.0 / 3.0
    wa_t = _xavier_uniform(k_wa, (da, dim), gain)   # torch Linear(dim, da).weight
    wb_t = _xavier_uniform(k_wb, (1, da), gain)     # torch Linear(da, 1).weight
    wa = wa_t.T                                     # (dim, da)
    wb = wb_t.T                                     # (da, 1)

    x = jax.random.normal(k_x, (B, N, dim), dtype=jnp.float32)
    mask = (jax.random.uniform(k_m, (B, N, 1)) > 0.3).astype(jnp.float32)

    out = self_attention_pallas(x, wa, wb, mask)
    jax.block_until_ready(out)
    ref = reference_jax(x, wa, wb, mask)
    assert out.shape == (B, dim)
    assert jnp.allclose(out, ref, atol=1e-3, rtol=1e-3)

    # mask=None path compiles a specialized (no-mask) kernel.
    out_nm = self_attention_pallas(x, wa, wb, None)
    jax.block_until_ready(out_nm)
    assert jnp.allclose(out_nm, reference_jax(x, wa, wb, None),
                        atol=1e-3, rtol=1e-3)

    # Multi-step grid with a ragged last batch block (B=20, block_b=8):
    # exercises the no-padding path.
    B2 = 20
    x2 = jax.random.normal(k_x2, (B2, N, dim), dtype=jnp.float32)
    mask2 = (jax.random.uniform(k_m2, (B2, N, 1)) > 0.3).astype(jnp.float32)
    out2 = self_attention_pallas(x2, wa, wb, mask2, block_b=8)
    jax.block_until_ready(out2)
    assert out2.shape == (B2, dim)
    assert jnp.allclose(out2, reference_jax(x2, wa, wb, mask2),
                        atol=1e-3, rtol=1e-3)

    print("KERNEL_OK")
</pallas_src>

<mosaic_0001>
module attributes {stable_mosaic.version = 11 : i64} {
  func.func @kernel(%arg0: i32, %arg1: memref<2x8x32xf32, #tpu.memory_space<vmem>>, %arg2: memref<32x16xf32, #tpu.memory_space<vmem>>, %arg3: memref<1x16xf32, #tpu.memory_space<vmem>>, %arg4: memref<2x8xf32, #tpu.memory_space<vmem>>, %arg5: memref<2x32xf32, #tpu.memory_space<vmem>>) attributes {dimension_semantics = [#tpu.dimension_semantics<parallel>], iteration_bounds = array<i64: 1>, scalar_prefetch = 0 : i64, scratch_operands = 0 : i64, tpu.core_type = #tpu.core_type<tc>, window_params = [{transform_indices = @transform_0, window_bounds = array<i64: 2, 8, 32>}, {pipeline_mode = #tpu.pipeline_mode<synchronous>, transform_indices = @transform_1, window_bounds = array<i64: 32, 16>}, {pipeline_mode = #tpu.pipeline_mode<synchronous>, transform_indices = @transform_2, window_bounds = array<i64: 1, 16>}, {transform_indices = @transform_3, window_bounds = array<i64: 2, 8>}, {transform_indices = @transform_4, window_bounds = array<i64: 2, 32>}]} {
    %c0 = arith.constant 0 : index
    %c0_0 = arith.constant 0 : index
    %c0_1 = arith.constant 0 : index
    %0 = vector.load %arg1[%c0, %c0_0, %c0_1] : memref<2x8x32xf32, #tpu.memory_space<vmem>>, vector<2x8x32xf32>
    %c0_2 = arith.constant 0 : index
    %c0_3 = arith.constant 0 : index
    %1 = vector.load %arg2[%c0_2, %c0_3] : memref<32x16xf32, #tpu.memory_space<vmem>>, vector<32x16xf32>
    %c0_4 = arith.constant 0 : index
    %c0_5 = arith.constant 0 : index
    %2 = vector.load %arg3[%c0_4, %c0_5] : memref<1x16xf32, #tpu.memory_space<vmem>>, vector<1x16xf32>
    %3 = vector.shape_cast %0 : vector<2x8x32xf32> to vector<16x32xf32>
    %cst = arith.constant dense<0.000000e+00> : vector<16x16xf32>
    %4 = tpu.matmul %3, %1, %cst {dimension_numbers = #tpu.dot_dimension_numbers<[1], [0], [0], [1], [0, 0, 1, 1], [], []>} : vector<16x32xf32>, vector<32x16xf32>, vector<16x16xf32> -> vector<16x16xf32>
    %5 = math.tanh %4 : vector<16x16xf32>
    %6 = vector.shape_cast %5 : vector<16x16xf32> to vector<2x8x16xf32>
    %7 = vector.shape_cast %2 : vector<1x16xf32> to vector<1x1x16xf32>
    %8 = vector.broadcast %7 : vector<1x1x16xf32> to vector<2x8x16xf32>
    %9 = arith.mulf %6, %8 : vector<2x8x16xf32>
    %cst_6 = arith.constant dense<0.000000e+00> : vector<2x8xf32>
    %10 = vector.multi_reduction <add>, %9, %cst_6 [2] : vector<2x8x16xf32> to vector<2x8xf32>
    %c0_7 = arith.constant 0 : index
    %c0_8 = arith.constant 0 : index
    %11 = vector.load %arg4[%c0_7, %c0_8] : memref<2x8xf32, #tpu.memory_space<vmem>>, vector<2x8xf32>
    %12 = arith.mulf %10, %11 : vector<2x8xf32>
    %cst_9 = arith.constant dense<0xFF800000> : vector<2xf32>
    %13 = vector.multi_reduction <maximumf>, %12, %cst_9 [1] : vector<2x8xf32> to vector<2xf32>
    %14 = vector.shape_cast %13 : vector<2xf32> to vector<2x1xf32>
    %15 = vector.broadcast %14 : vector<2x1xf32> to vector<2x8xf32>
    %16 = arith.subf %12, %15 : vector<2x8xf32>
    %17 = math.exp %16 : vector<2x8xf32>
    %cst_10 = arith.constant dense<0.000000e+00> : vector<2xf32>
    %18 = vector.multi_reduction <add>, %17, %cst_10 [1] : vector<2x8xf32> to vector<2xf32>
    %19 = vector.shape_cast %18 : vector<2xf32> to vector<2x1xf32>
    %20 = tpu.reciprocal %19 : vector<2x1xf32> -> vector<2x1xf32>
    %21 = vector.broadcast %20 : vector<2x1xf32> to vector<2x8xf32>
    %22 = arith.mulf %17, %21 : vector<2x8xf32>
    %23 = vector.shape_cast %22 : vector<2x8xf32> to vector<2x1x8xf32>
    "tpu.trace_start"() <{level = 10 : i32, message = "bqn,bnd->bqd"}> : () -> ()
    %cst_11 = arith.constant dense<0.000000e+00> : vector<2x1x32xf32>
    %24 = tpu.matmul %23, %0, %cst_11 {dimension_numbers = #tpu.dot_dimension_numbers<[2], [1], [1], [2], [0, 0, 0, 1, 1, 2], [0], [0]>} : vector<2x1x8xf32>, vector<2x8x32xf32>, vector<2x1x32xf32> -> vector<2x1x32xf32>
    "tpu.trace_stop"() : () -> ()
    %25 = vector.shape_cast %24 : vector<2x1x32xf32> to vector<2x32xf32>
    %c0_12 = arith.constant 0 : index
    %c0_13 = arith.constant 0 : index
    %26 = vector.load %arg5[%c0_12, %c0_13] : memref<2x32xf32, #tpu.memory_space<vmem>>, vector<2x32xf32>
    tpu.vector_store %arg5[%c0_12, %c0_13], %25 {strides = array<i32>} : memref<2x32xf32, #tpu.memory_space<vmem>>, vector<2x32xf32>,
    return
  }
  func.func @transform_0(%arg0: i32) -> (i32, i32, i32) {
    %c0_i32 = arith.constant 0 : i32
    %c0_i32_0 = arith.constant 0 : i32
    %c0_i32_1 = arith.constant 0 : i32
    return %arg0, %c0_i32, %c0_i32_0 : i32, i32, i32
  }
  func.func @transform_1(%arg0: i32) -> (i32, i32) {
    %c0_i32 = arith.constant 0 : i32
    %c0_i32_0 = arith.constant 0 : i32
    %c0_i32_1 = arith.constant 0 : i32
    return %c0_i32, %c0_i32_0 : i32, i32
  }
  func.func @transform_2(%arg0: i32) -> (i32, i32) {
    %c0_i32 = arith.constant 0 : i32
    %c0_i32_0 = arith.constant 0 : i32
    %c0_i32_1 = arith.constant 0 : i32
    return %c0_i32, %c0_i32_0 : i32, i32
  }
  func.func @transform_3(%arg0: i32) -> (i32, i32) {
    %c0_i32 = arith.constant 0 : i32
    %c0_i32_0 = arith.constant 0 : i32
    return %arg0, %c0_i32 : i32, i32
  }
  func.func @transform_4(%arg0: i32) -> (i32, i32) {
    %c0_i32 = arith.constant 0 : i32
    %c0_i32_0 = arith.constant 0 : i32
    return %arg0, %c0_i32 : i32, i32
  }
}

</mosaic_0001>

<llo_original>
// kernel: tpu_custom_call.1
$region0: #{tpu_custom_call.1}
  #allocation0 [shape = 'u32[]', space=smem, size = 0x4, offset = 0x4, fixed_abs, tag = 'smem constant byte address 0x4 - core index']
  #allocation1 [shape = 'u32[72,128]{1,0:T(1,128)}', space=vmem, size = 0x9000, scoped, tag = 'internal scratch']
  %s0 = inlined_call_operand.vmem [shape: f32[2,8,32], index: 0, kind: input, shape index: {}]
  %s1 = inlined_call_operand.vmem [shape: f32[32,16], index: 1, kind: input, shape index: {}]
  %s2 = inlined_call_operand.vmem [shape: f32[1,16], index: 2, kind: input, shape index: {}]
  %s3 = inlined_call_operand.vmem [shape: f32[2,8], index: 3, kind: input, shape index: {}]
  %s4 = inlined_call_operand.hbm [shape: f32[2,32], index: 4, kind: output, shape index: {}]
  %s5 = sld [smem:[#allocation0]]
  $region26: #{tpu_custom_call.1} parent=0
    _
  %s7 = ssub.s32 1, %s5
  %s8 = scalar_select 0, %s7, %s5
  $region1: #{tpu_custom_call.1} parent=0
    #allocation2 [shape = 'u8[1024]{0}', space=vmem, size = 0x400, scoped, tag = 'output window, operand 0, single buffered']
    #allocation3 [shape = 's32[1]{0}', space=sflag, size = 0x4, scoped, tag = 'scoped memory for tpu_custom_call.1']
    %9 = vsyncpa [#allocation3], 0
    // Predicated region
    $region2: #{tpu_custom_call.1} parent=1 // pred_check
      _
    $region3: #{tpu_custom_call.1} parent=1 // pred_check_branch
      %11 = sbr.rel (0) target = $region5
    $region4: #{tpu_custom_call.1} parent=1 // pred_region
      _
    $region5: #{tpu_custom_call.1} parent=1 // pred_fallthru
      _
    // Predicated region
    $region6: #{tpu_custom_call.1} parent=1 // pred_check
      _
    $region7: #{tpu_custom_call.1} parent=1 // pred_check_branch
      %13 = sbr.rel (0) target = $region9
    $region8: #{tpu_custom_call.1} parent=1 // pred_region
      _
    $region9: #{tpu_custom_call.1} parent=1 // pred_fallthru
      _
    // Predicated region
    $region10: #{tpu_custom_call.1} parent=1 // pred_check
      _
    $region11: #{tpu_custom_call.1} parent=1 // pred_check_branch
      %15 = sbr.rel (0) target = $region13
    $region12: #{tpu_custom_call.1} parent=1 // pred_region
      _
    $region13: #{tpu_custom_call.1} parent=1 // pred_fallthru
      _
    // Predicated region
    $region14: #{tpu_custom_call.1} parent=1 // pred_check
      _
    $region15: #{tpu_custom_call.1} parent=1 // pred_check_branch
      %17 = sbr.rel (0) target = $region17
    $region16: #{tpu_custom_call.1} parent=1 // pred_region
      _
    $region17: #{tpu_custom_call.1} parent=1 // pred_fallthru
      _
    %v18 = vld [vmem:[%s0] sm:$0xff]
    %v19 = vld [vmem:[%s0 + $0x8] sm:$0xff]
    %v20 = vld [vmem:[%s1] sm:$0xff]
    %v21 = vld [vmem:[%s1 + $0x8] sm:$0xff]
    %v22 = vld [vmem:[%s1 + $0x10] sm:$0xff]
    %v23 = vld [vmem:[%s1 + $0x18] sm:$0xff]
    %v24 = vld [vmem:[%s2] sm:$0x1]
    %vm25 = vcmask 261120
    %v27 = vsel %vm25, %v18, 0
    %v30 = vsel %vm25, %v19, 0
    %32 = vmatpush.msra.mxu0 0.0
    %33 = vmatpush.msra.mxu0 0.0
    %34 = vmatpush.msra.mxu0 0.0
    %35 = vmatpush.msra.mxu0 0.0
    %36 = vmatpush.msra.mxu0 0.0
    %37 = vmatpush.msra.mxu0 0.0
    %38 = vmatpush.msra.mxu0 0.0
    %39 = vmatpush.msra.mxu0 0.0
    %40 = vmatpush.msra.mxu0 0.0
    %41 = vmatpush.msra.mxu0 0.0
    %42 = vmatpush.msra.mxu0 0.0
    %43 = vmatpush.msra.mxu0 0.0
    %44 = vmatpush.msra.mxu0 %v23
    %45 = vmatpush.msra.mxu0 %v22
    %46 = vmatpush.msra.mxu0 %v21
    %47 = vmatpush.msra.mxu0 %v20
    %48 = vmatmul.f32.gmra.mxu0 %v27
    %v49 = vpop.f32.mrf.mxu0
    %v50 = vadd.f32 0.0, %v49
    %51 = vmatmul.f32.gmra.mxu0 %v30
    %v52 = vpop.f32.mrf.mxu0
    %v53 = vadd.f32 0.0, %v52
    %54 = vdwg.mxu0
    %v55 = vtanh.pop %v50
    %v56 = vtanh.pop %v53
    %v58 = vperm.slane %v24, 0
    %v60 = vmul.f32 %v55, %v58
    %v61 = vmul.f32 %v56, %v58
    %vm62 = vcmask 130048
    %v63 = vsel %vm62, %v60, 0.0
    %64 = vadd.xlane.f32.xlu0 %v63
    %v65 = vpop.xlane.xlu0 %64
    %v66 = vsel %vm62, %v61, 0.0
    %67 = vadd.xlane.f32.xlu0 %v66
    %v68 = vpop.xlane.xlu0 %67
    %v69 = vld [vmem:[%s3] sm:$0x3]
    %v71 = vperm.slane %v69, 0
    %v72 = vlaneseq
    %v73 = vshrl.u32 %v72, 7
    %75 = vset.pattern.permute.xlu0 %v73
    %76 = vperm.xlu0 %75, %v71
    %v77 = vpop.permute.xlu0 %76
    %v78 = vperm.slane %v69, 1
    %v79 = vlaneseq
    %v80 = vshrl.u32 %v79, 7
    %82 = vset.pattern.permute.xlu0 %v80
    %83 = vperm.xlu0 %82, %v78
    %v84 = vpop.permute.xlu0 %83
    %v87 = vmul.f32 %v65, %v77
    %v88 = vmul.f32 %v68, %v84
    %91 = vset.pattern.permute.xlu0 0
    %92 = vperm.xlu0 %91, %v87
    %v93 = vpop.permute.xlu0 %92
    %94 = vset.pattern.permute.xlu0 0
    %95 = vperm.xlu0 %94, %v88
    %v96 = vpop.permute.xlu0 %95
    %v97 = vlaneseq
    %v98 = vand.u32 %v97, 127
    %v99 = vperm.slane %v93, %v98
    %v100 = vperm.slane %v96, %v98
    %vm101 = vcmask 1041409
    %v102 = vsel %vm101, %v100, %v99
    %vm104 = vcmask 58368
    %v105 = vsel %vm104, %v102, -inf
    %106 = vmax.xlane.f32.xlu0 %v105
    %v107 = vpop.xlane.xlu0 %106
    %v109 = vperm.slane %v107, 0
    %v110 = vperm.slane %v107, 1
    %v113 = vsub.f32 %v87, %v109
    %v114 = vsub.f32 %v88, %v110
    %v115 = vmul.f32 %v113, 1.442695
    %v116 = vpow.pop %v115
    %v117 = vmul.f32 %v114, 1.442695
    %v118 = vpow.pop %v117
    %121 = vset.pattern.permute.xlu0 0
    %122 = vperm.xlu0 %121, %v116
    %v123 = vpop.permute.xlu0 %122
    %124 = vset.pattern.permute.xlu0 0
    %125 = vperm.xlu0 %124, %v118
    %v126 = vpop.permute.xlu0 %125
    %v127 = vperm.slane %v123, %v98
    %v128 = vperm.slane %v126, %v98
    %v129 = vsel %vm101, %v128, %v127
    %v131 = vsel %vm104, %v129, 0.0
    %132 = vadd.xlane.f32.xlu0 %v131
    %v133 = vpop.xlane.xlu0 %132
    %v134 = vrcp.pop %v133
    %v135 = vmul.f32 %v133, %v134
    %v136 = vsub.f32 1.0, %v135
    %v137 = vmul.f32 %v134, %v136
    %v138 = vadd.f32 %v134, %v137
    %vm139 = vweird.f32 %v133
    %vm140 = vweird.f32 %v134
    %vm141 = vmor %vm139, %vm140
    %v142 = vsel %vm141, %v134, %v138
    %v143 = vand.u32 2147483647, %v133
    %vm144 = vcmp.eq.f32.partialorder %v143, 8.507059e+37
    %v145 = vand.u32 %v133, 2147483648
    %v146 = vor.u32 1.1754944e-38, %v145
    %v147 = vsel %vm144, %v146, %v142
    %v149 = vperm.slane %v147, 0
    %v150 = vperm.slane %v147, 1
    %v153 = vmul.f32 %v116, %v149
    %v154 = vmul.f32 %v118, %v150
    %156 = vset.pattern.permute.xlu0 0
    %157 = vperm.xlu0 %156, %v153
    %v158 = vpop.permute.xlu0 %157
    %v159 = vperm.slane %v158, %v98
    %vm160 = vcmask 64512
    %v161 = vsel %vm160, %v159, 0
    %163 = vmatpush.msra.mxu0 0.0
    %164 = vmatpush.msra.mxu0 0.0
    %165 = vmatpush.msra.mxu0 0.0
    %166 = vmatpush.msra.mxu0 0.0
    %167 = vmatpush.msra.mxu0 0.0
    %168 = vmatpush.msra.mxu0 0.0
    %169 = vmatpush.msra.mxu0 0.0
    %170 = vmatpush.msra.mxu0 0.0
    %171 = vmatpush.msra.mxu0 0.0
    %172 = vmatpush.msra.mxu0 0.0
    %173 = vmatpush.msra.mxu0 0.0
    %174 = vmatpush.msra.mxu0 0.0
    %175 = vmatpush.msra.mxu0 0.0
    %176 = vmatpush.msra.mxu0 0.0
    %177 = vmatpush.msra.mxu0 0.0
    %178 = vmatpush.msra.mxu0 %v18
    %179 = vmatmul.f32.gmra.mxu0 %v161
    %v180 = vpop.f32.mrf.mxu0
    %v181 = vadd.f32 0.0, %v180
    %182 = vdwg.mxu0
    %184 = vset.pattern.permute.xlu0 0
    %185 = vperm.xlu0 %184, %v154
    %v186 = vpop.permute.xlu0 %185
    %v187 = vperm.slane %v186, %v98
    %v188 = vsel %vm160, %v187, 0
    %190 = vmatpush.msra.mxu0 0.0
    %191 = vmatpush.msra.mxu0 0.0
    %192 = vmatpush.msra.mxu0 0.0
    %193 = vmatpush.msra.mxu0 0.0
    %194 = vmatpush.msra.mxu0 0.0
    %195 = vmatpush.msra.mxu0 0.0
    %196 = vmatpush.msra.mxu0 0.0
    %197 = vmatpush.msra.mxu0 0.0
    %198 = vmatpush.msra.mxu0 0.0
    %199 = vmatpush.msra.mxu0 0.0
    %200 = vmatpush.msra.mxu0 0.0
    %201 = vmatpush.msra.mxu0 0.0
    %202 = vmatpush.msra.mxu0 0.0
    %203 = vmatpush.msra.mxu0 0.0
    %204 = vmatpush.msra.mxu0 0.0
    %205 = vmatpush.msra.mxu0 %v19
    %206 = vmatmul.f32.gmra.mxu0 %v188
    %v207 = vpop.f32.mrf.mxu0
    %v208 = vadd.f32 0.0, %v207
    %209 = vdwg.mxu0
    %v212 = vrot.slane %v208, 7
    %v213 = vsel %vm101, %v212, %v181
    %vm215 = vcmask 254976
    %216 = vst.msk [vmem:[#allocation2] sm:$0x3] %vm215, %v213
    // Predicated region
    $region18: #{tpu_custom_call.1} parent=1 // pred_check
      _
    $region19: #{tpu_custom_call.1} parent=1 // pred_check_branch
      %218 = sbr.rel (0) target = $region21
    $region20: #{tpu_custom_call.1} parent=1 // pred_region
      %220 = vsyncadd [#allocation3], 0
      %s222 = sshll.u32 [#allocation2], 4
      %s223 = int_to_ptr.vmem [resolvable:$true] %s222
      %s224 = sshll.u32 %s4, 4
      %s225 = int_to_ptr.hbm [resolvable:$true] %s224
      %227 = dma.vmem_to_hbm [thread:$0]  %s223, 32, %s225, [#allocation3]
    $region21: #{tpu_custom_call.1} parent=1 // pred_fallthru
      _
    // Predicated region
    $region22: #{tpu_custom_call.1} parent=1 // pred_check
      _
    $region23: #{tpu_custom_call.1} parent=1 // pred_check_branch
      %229 = sbr.rel (0) target = $region25
    $region24: #{tpu_custom_call.1} parent=1 // pred_region
      %231 = dma.done [#allocation3], 32
    $region25: #{tpu_custom_call.1} parent=1 // pred_fallthru
      _
    %232 = vsyncpa [#allocation3], 1

</llo_original>
